<compile_context>
chip_gen: v5e
topology: v5e:2x2
jax: 0.10.0
libtpu: 0.0.40
codegen_flags: <defaults>
</compile_context>

<pallas_src>
import jax
import jax.numpy as jnp
from jax import lax
from jax.experimental import pallas as pl
from jax.experimental.pallas import tpu as pltpu

EPS = 1e-5
MOMENTUM = 0.9

# Tile caps: a single (TILE_C, TILE_HW) f32 tile <= 2 MiB keeps double-buffered
# input + output tiles comfortably inside v7x's 64 MiB VMEM (and the 32 MiB
# scoped limit below) while staying wide enough (>=512 lanes when possible)
# for the ~85% HBM-roofline regime.
_MAX_TILE_C = 256
_MAX_TILE_HW = 2048
_VMEM_LIMIT = 32 * 1024 * 1024


def _pick_tile(n, max_tile, quantum):
    """Largest divisor of n that is a multiple of `quantum` and <= max_tile.

    Falls back to the full extent (always a legal block size)."""
    if n <= max_tile:
        return n
    start = max_tile - (max_tile % quantum)
    for t in range(start, 0, -quantum):
        if n % t == 0:
            return t
    return n


def _bn_stats_kernel(x_ref, sum_ref, sumsq_ref):
    # x_ref: (TILE_C, TILE_HW)  (B dim squeezed by the BlockSpec)
    # sum_ref / sumsq_ref: (TILE_C, 1) f32, resident accumulators across the
    # reduction grid axes (B, HW-tiles).
    @pl.when((pl.program_id(1) == 0) & (pl.program_id(2) == 0))
    def _():
        sum_ref[...] = jnp.zeros_like(sum_ref)
        sumsq_ref[...] = jnp.zeros_like(sumsq_ref)

    x = x_ref[...].astype(jnp.float32)
    sum_ref[...] += jnp.sum(x, axis=-1, keepdims=True)
    sumsq_ref[...] += jnp.sum(x * x, axis=-1, keepdims=True)


def _bn_scale_kernel(x_ref, scale_ref, bias_ref, y_ref):
    # Folded affine: y = x * scale + bias (scale/bias broadcast over lanes).
    x = x_ref[...].astype(jnp.float32)
    y_ref[...] = (x * scale_ref[...] + bias_ref[...]).astype(y_ref.dtype)


@jax.jit
def batch_norm_forward(x, gamma, beta, moving_mean, moving_var):
    """x: (B, C, H, W). gamma/beta/moving_*: (1, C, 1, 1).

    Returns (y, new_moving_mean, new_moving_var) matching the PyTorch
    training-mode forward of Batch_Norm (4-D path).
    """
    B, C, H, W = x.shape
    HW = H * W
    M = B * HW

    tile_c = _pick_tile(C, _MAX_TILE_C, 8)
    tile_hw = _pick_tile(HW, _MAX_TILE_HW, 128)
    nc = C // tile_c
    nhw = HW // tile_hw
    grid = (nc, B, nhw)

    # Free, contiguous reshapes -- no HBM transpose traffic.
    x3d = x.reshape(B, C, HW)
    g2d = gamma.reshape(C, 1).astype(jnp.float32)
    b2d = beta.reshape(C, 1).astype(jnp.float32)
    mm2d = moving_mean.reshape(C, 1).astype(jnp.float32)
    mv2d = moving_var.reshape(C, 1).astype(jnp.float32)

    # ---- pass 1: per-channel sum / sum-of-squares (f32 accumulation) ------
    sums, sumsqs = pl.pallas_call(
        _bn_stats_kernel,
        out_shape=(
            jax.ShapeDtypeStruct((C, 1), jnp.float32),
            jax.ShapeDtypeStruct((C, 1), jnp.float32),
        ),
        grid_spec=pltpu.PrefetchScalarGridSpec(
            num_scalar_prefetch=0,
            grid=grid,
            in_specs=[
                pl.BlockSpec((None, tile_c, tile_hw), lambda c, b, m: (b, c, m)),
            ],
            out_specs=(
                pl.BlockSpec((tile_c, 1), lambda c, b, m: (c, 0)),
                pl.BlockSpec((tile_c, 1), lambda c, b, m: (c, 0)),
            ),
        ),
        compiler_params=pltpu.CompilerParams(
            dimension_semantics=("parallel", "arbitrary", "arbitrary"),
            vmem_limit_bytes=_VMEM_LIMIT,
        ),
    )(x3d)

    # ---- tiny O(C) finalize in plain JAX (per-channel scalars) ------------
    inv_m = 1.0 / float(M)
    mean = sums * inv_m                                        # (C, 1)
    var = jnp.maximum(sumsqs * inv_m - mean * mean, 0.0)       # biased variance
    scale = g2d * lax.rsqrt(var + EPS)                         # (C, 1)
    bias = b2d - mean * scale                                  # (C, 1)
    new_mm = MOMENTUM * mm2d + (1.0 - MOMENTUM) * mean
    new_mv = MOMENTUM * mv2d + (1.0 - MOMENTUM) * var

    # ---- pass 2: y = x * scale + bias --------------------------------------
    y3d = pl.pallas_call(
        _bn_scale_kernel,
        out_shape=jax.ShapeDtypeStruct((B, C, HW), x.dtype),
        grid_spec=pltpu.PrefetchScalarGridSpec(
            num_scalar_prefetch=0,
            grid=grid,
            in_specs=[
                pl.BlockSpec((None, tile_c, tile_hw), lambda c, b, m: (b, c, m)),
                pl.BlockSpec((tile_c, 1), lambda c, b, m: (c, 0)),
                pl.BlockSpec((tile_c, 1), lambda c, b, m: (c, 0)),
            ],
            out_specs=pl.BlockSpec(
                (None, tile_c, tile_hw), lambda c, b, m: (b, c, m)
            ),
        ),
        compiler_params=pltpu.CompilerParams(
            dimension_semantics=("parallel", "parallel", "arbitrary"),
            vmem_limit_bytes=_VMEM_LIMIT,
        ),
    )(x3d, scale, bias)

    y = y3d.reshape(B, C, H, W)
    return y, new_mm.reshape(1, C, 1, 1), new_mv.reshape(1, C, 1, 1)


def _reference(x, gamma, beta, moving_mean, moving_var):
    mean = x.mean(axis=(0, 2, 3), keepdims=True)
    var = ((x - mean) ** 2).mean(axis=(0, 2, 3), keepdims=True)
    x_hat = (x - mean) / jnp.sqrt(var + EPS)
    y = gamma * x_hat + beta
    new_mm = MOMENTUM * moving_mean + (1.0 - MOMENTUM) * mean
    new_mv = MOMENTUM * moving_var + (1.0 - MOMENTUM) * var
    return y, new_mm, new_mv


if __name__ == "__main__":
    key = jax.random.PRNGKey(0)
    B, C, H, W = 2, 4, 16, 16
    x = jax.random.normal(key, (B, C, H, W), dtype=jnp.float32)

    # Deterministic parameter init per Batch_Norm.__init__ (num_dims=4):
    gamma = jnp.ones((1, C, 1, 1), dtype=jnp.float32)
    beta = jnp.zeros((1, C, 1, 1), dtype=jnp.float32)
    moving_mean = jnp.zeros((1, C, 1, 1), dtype=jnp.float32)
    moving_var = jnp.zeros((1, C, 1, 1), dtype=jnp.float32)

    y, new_mm, new_mv = batch_norm_forward(x, gamma, beta, moving_mean, moving_var)
    jax.block_until_ready((y, new_mm, new_mv))

    y_ref, mm_ref, mv_ref = _reference(x, gamma, beta, moving_mean, moving_var)
    assert jnp.allclose(y, y_ref, atol=1e-5, rtol=1e-5)
    assert jnp.allclose(new_mm, mm_ref, atol=1e-6, rtol=1e-5)
    assert jnp.allclose(new_mv, mv_ref, atol=1e-6, rtol=1e-5)

    # TODO(synk): num_dims=2 (fully-connected) variant and the eval-mode
    # (moving-stats) path are not wired; only the 4-D training forward is.
    print("KERNEL_OK")
</pallas_src>

<mosaic_0001>
module attributes {stable_mosaic.version = 11 : i64} {
  func.func @_bn_stats_kernel(%arg0: i32, %arg1: i32, %arg2: i32, %arg3: memref<1x4x256xf32, #tpu.memory_space<vmem>>, %arg4: memref<4x1xf32, #tpu.memory_space<vmem>>, %arg5: memref<4x1xf32, #tpu.memory_space<vmem>>) attributes {dimension_semantics = [#tpu.dimension_semantics<parallel>, #tpu.dimension_semantics<arbitrary>, #tpu.dimension_semantics<arbitrary>], iteration_bounds = array<i64: 1, 2, 1>, scalar_prefetch = 0 : i64, scratch_operands = 0 : i64, tpu.core_type = #tpu.core_type<tc>, window_params = [{transform_indices = @transform_0, window_bounds = array<i64: 1, 4, 256>}, {transform_indices = @transform_1, window_bounds = array<i64: 4, 1>}, {transform_indices = @transform_2, window_bounds = array<i64: 4, 1>}]} {
    %c0_i32 = arith.constant 0 : i32
    %0 = arith.cmpi eq, %arg1, %c0_i32 : i32
    %c0_i32_0 = arith.constant 0 : i32
    %1 = arith.cmpi eq, %arg2, %c0_i32_0 : i32
    %2 = arith.andi %0, %1 : i1
    %3 = arith.extui %2 : i1 to i32
    %c0_i32_1 = arith.constant 0 : i32
    %4 = arith.cmpi ne, %3, %c0_i32_1 : i32
    scf.if %4 {
      %cst_13 = arith.constant 0.000000e+00 : f32
      %18 = vector.broadcast %cst_13 : f32 to vector<4x1xf32>
      %c0_14 = arith.constant 0 : index
      %c0_15 = arith.constant 0 : index
      %19 = vector.load %arg4[%c0_14, %c0_15] : memref<4x1xf32, #tpu.memory_space<vmem>>, vector<4x1xf32>
      tpu.vector_store %arg4[%c0_14, %c0_15], %18 {strides = array<i32>} : memref<4x1xf32, #tpu.memory_space<vmem>>, vector<4x1xf32>,
      %cst_16 = arith.constant 0.000000e+00 : f32
      %20 = vector.broadcast %cst_16 : f32 to vector<4x1xf32>
      %c0_17 = arith.constant 0 : index
      %c0_18 = arith.constant 0 : index
      %21 = vector.load %arg5[%c0_17, %c0_18] : memref<4x1xf32, #tpu.memory_space<vmem>>, vector<4x1xf32>
      tpu.vector_store %arg5[%c0_17, %c0_18], %20 {strides = array<i32>} : memref<4x1xf32, #tpu.memory_space<vmem>>, vector<4x1xf32>,
    } else {
    }
    %c0 = arith.constant 0 : index
    %c0_2 = arith.constant 0 : index
    %c0_3 = arith.constant 0 : index
    %5 = vector.load %arg3[%c0, %c0_2, %c0_3] : memref<1x4x256xf32, #tpu.memory_space<vmem>>, vector<1x4x256xf32>
    %6 = vector.shape_cast %5 : vector<1x4x256xf32> to vector<4x256xf32>
    %c0_4 = arith.constant 0 : index
    %c0_5 = arith.constant 0 : index
    %7 = vector.load %arg4[%c0_4, %c0_5] : memref<4x1xf32, #tpu.memory_space<vmem>>, vector<4x1xf32>
    %cst = arith.constant dense<0.000000e+00> : vector<4xf32>
    %8 = vector.multi_reduction <add>, %6, %cst [1] : vector<4x256xf32> to vector<4xf32>
    %9 = vector.shape_cast %8 : vector<4xf32> to vector<4x1xf32>
    %10 = arith.addf %7, %9 : vector<4x1xf32>
    %c0_6 = arith.constant 0 : index
    %c0_7 = arith.constant 0 : index
    %11 = vector.load %arg4[%c0_6, %c0_7] : memref<4x1xf32, #tpu.memory_space<vmem>>, vector<4x1xf32>
    tpu.vector_store %arg4[%c0_6, %c0_7], %10 {strides = array<i32>} : memref<4x1xf32, #tpu.memory_space<vmem>>, vector<4x1xf32>,
    %c0_8 = arith.constant 0 : index
    %c0_9 = arith.constant 0 : index
    %12 = vector.load %arg5[%c0_8, %c0_9] : memref<4x1xf32, #tpu.memory_space<vmem>>, vector<4x1xf32>
    %13 = arith.mulf %6, %6 : vector<4x256xf32>
    %cst_10 = arith.constant dense<0.000000e+00> : vector<4xf32>
    %14 = vector.multi_reduction <add>, %13, %cst_10 [1] : vector<4x256xf32> to vector<4xf32>
    %15 = vector.shape_cast %14 : vector<4xf32> to vector<4x1xf32>
    %16 = arith.addf %12, %15 : vector<4x1xf32>
    %c0_11 = arith.constant 0 : index
    %c0_12 = arith.constant 0 : index
    %17 = vector.load %arg5[%c0_11, %c0_12] : memref<4x1xf32, #tpu.memory_space<vmem>>, vector<4x1xf32>
    tpu.vector_store %arg5[%c0_11, %c0_12], %16 {strides = array<i32>} : memref<4x1xf32, #tpu.memory_space<vmem>>, vector<4x1xf32>,
    return
  }
  func.func @transform_0(%arg0: i32, %arg1: i32, %arg2: i32) -> (i32, i32, i32) {
    %c0_i32 = arith.constant 0 : i32
    return %arg1, %arg0, %arg2 : i32, i32, i32
  }
  func.func @transform_1(%arg0: i32, %arg1: i32, %arg2: i32) -> (i32, i32) {
    %c0_i32 = arith.constant 0 : i32
    %c0_i32_0 = arith.constant 0 : i32
    return %arg0, %c0_i32 : i32, i32
  }
  func.func @transform_2(%arg0: i32, %arg1: i32, %arg2: i32) -> (i32, i32) {
    %c0_i32 = arith.constant 0 : i32
    %c0_i32_0 = arith.constant 0 : i32
    return %arg0, %c0_i32 : i32, i32
  }
}

module attributes {stable_mosaic.version = 11 : i64} {
  func.func @_bn_scale_kernel(%arg0: i32, %arg1: i32, %arg2: i32, %arg3: memref<1x4x256xf32, #tpu.memory_space<vmem>>, %arg4: memref<4x1xf32, #tpu.memory_space<vmem>>, %arg5: memref<4x1xf32, #tpu.memory_space<vmem>>, %arg6: memref<1x4x256xf32, #tpu.memory_space<vmem>>) attributes {dimension_semantics = [#tpu.dimension_semantics<parallel>, #tpu.dimension_semantics<parallel>, #tpu.dimension_semantics<arbitrary>], iteration_bounds = array<i64: 1, 2, 1>, scalar_prefetch = 0 : i64, scratch_operands = 0 : i64, tpu.core_type = #tpu.core_type<tc>, window_params = [{transform_indices = @transform_0, window_bounds = array<i64: 1, 4, 256>}, {transform_indices = @transform_1, window_bounds = array<i64: 4, 1>}, {transform_indices = @transform_2, window_bounds = array<i64: 4, 1>}, {transform_indices = @transform_3, window_bounds = array<i64: 1, 4, 256>}]} {
    %c0 = arith.constant 0 : index
    %c0_0 = arith.constant 0 : index
    %c0_1 = arith.constant 0 : index
    %0 = vector.load %arg3[%c0, %c0_0, %c0_1] : memref<1x4x256xf32, #tpu.memory_space<vmem>>, vector<1x4x256xf32>
    %1 = vector.shape_cast %0 : vector<1x4x256xf32> to vector<4x256xf32>
    %c0_2 = arith.constant 0 : index
    %c0_3 = arith.constant 0 : index
    %2 = vector.load %arg4[%c0_2, %c0_3] : memref<4x1xf32, #tpu.memory_space<vmem>>, vector<4x1xf32>
    %3 = vector.broadcast %2 : vector<4x1xf32> to vector<4x256xf32>
    %4 = arith.mulf %1, %3 : vector<4x256xf32>
    %c0_4 = arith.constant 0 : index
    %c0_5 = arith.constant 0 : index
    %5 = vector.load %arg5[%c0_4, %c0_5] : memref<4x1xf32, #tpu.memory_space<vmem>>, vector<4x1xf32>
    %6 = vector.broadcast %5 : vector<4x1xf32> to vector<4x256xf32>
    %7 = arith.addf %4, %6 : vector<4x256xf32>
    %c0_6 = arith.constant 0 : index
    %c0_7 = arith.constant 0 : index
    %c0_8 = arith.constant 0 : index
    %8 = vector.load %arg6[%c0_6, %c0_7, %c0_8] : memref<1x4x256xf32, #tpu.memory_space<vmem>>, vector<1x4x256xf32>
    %9 = vector.shape_cast %8 : vector<1x4x256xf32> to vector<4x256xf32>
    %10 = vector.shape_cast %7 : vector<4x256xf32> to vector<1x4x256xf32>
    tpu.vector_store %arg6[%c0_6, %c0_7, %c0_8], %10 {strides = array<i32>} : memref<1x4x256xf32, #tpu.memory_space<vmem>>, vector<1x4x256xf32>,
    return
  }
  func.func @transform_0(%arg0: i32, %arg1: i32, %arg2: i32) -> (i32, i32, i32) {
    %c0_i32 = arith.constant 0 : i32
    return %arg1, %arg0, %arg2 : i32, i32, i32
  }
  func.func @transform_1(%arg0: i32, %arg1: i32, %arg2: i32) -> (i32, i32) {
    %c0_i32 = arith.constant 0 : i32
    %c0_i32_0 = arith.constant 0 : i32
    return %arg0, %c0_i32 : i32, i32
  }
  func.func @transform_2(%arg0: i32, %arg1: i32, %arg2: i32) -> (i32, i32) {
    %c0_i32 = arith.constant 0 : i32
    %c0_i32_0 = arith.constant 0 : i32
    return %arg0, %c0_i32 : i32, i32
  }
  func.func @transform_3(%arg0: i32, %arg1: i32, %arg2: i32) -> (i32, i32, i32) {
    %c0_i32 = arith.constant 0 : i32
    return %arg1, %arg0, %arg2 : i32, i32, i32
  }
}

</mosaic_0001>

<llo_original>
// kernel: batch_norm_forward.3
$region0: #{batch_norm_forward.3}
  #allocation0 [shape = 'u32[]', space=smem, size = 0x4, offset = 0x4, fixed_abs, tag = 'smem constant byte address 0x4 - core index']
  #allocation1 [shape = 'u32[72,128]{1,0:T(1,128)}', space=vmem, size = 0x9000, scoped, tag = 'internal scratch']
  %s0 = inlined_call_operand.vmem [shape: f32[2,4,256], index: 0, kind: input, shape index: {}]
  %s1 = inlined_call_operand.vmem [shape: f32[4,1], index: 1, kind: input, shape index: {}]
  %s2 = inlined_call_operand.vmem [shape: f32[4,1], index: 2, kind: input, shape index: {}]
  %s3 = inlined_call_operand.vmem [shape: f32[2,4,256], index: 3, kind: output, shape index: {}]
  %s4 = sld [smem:[#allocation0]]
  $region45: #{batch_norm_forward.3} parent=0
    _
  %s6 = ssub.s32 1, %s4
  %s7 = scalar_select 0, %s6, %s4
  loop: start=0, step=1, limit=4
  $region2: #{batch_norm_forward.3} parent=0 // loop_pre_header
    _
  $region3: #{batch_norm_forward.3} parent=0 // loop_header
    %s9 = sphi 0, %s13
    %p10 = scmp.ge.s32.totalorder %s9, 4
    %s16 = sphi 0, %s35
    %s17 = sphi 0, %s31
    %s18 = sphi 0, %s27
    %s19 = sphi 0, %s16
    %s20 = sphi 0, %s17
    %s21 = sphi 0, %s18
    %s22 = sphi 0, %s19
    %s23 = sphi 0, %s20
    %s24 = sphi 0, %s21
    %s42 = sphi 0, %s44
    %s45 = sphi 0, %s42
    %s46 = sphi 0, %s45
    %s62 = sphi 0, %s46
    %s68 = sphi 0, %s70
    %s71 = sphi 0, %s68
    %s72 = sphi 0, %s71
    %s88 = sphi 0, %s72
    %s94 = sphi 0, %s96
    %s97 = sphi 0, %s94
    %s98 = sphi 0, %s97
    %s114 = sphi 0, %s98
    %s124 = sphi 0, %s126
    %s127 = sphi 0, %s124
    %s128 = sphi 0, %s127
    %s144 = sphi 0, %s128
  $region4: #{batch_norm_forward.3} parent=0 // loop_header_branch
    %12 = sbr.rel (%p10) target = $region8
  $region5: #{batch_norm_forward.3} parent=0 // loop_body
    %s14 = ssub.s32 %s9, 1
    %s15 = ssub.s32 %s9, 2
    %s25 = sadd.s32 1, %s18
    %p26 = scmp.ge.s32.totalorder %s25, 1
    %s27 = scalar_select %p26, 0, %s25
    %s28 = sadd.s32 1, %s17
    %s29 = scalar_select %p26, %s28, %s17
    %p30 = scmp.ge.s32.totalorder %s29, 2
    %s31 = scalar_select %p30, 0, %s29
    %s32 = sadd.s32 1, %s16
    %s33 = scalar_select %p30, %s32, %s16
    %p34 = scmp.ge.s32.totalorder %s33, 1
    %s35 = scalar_select %p34, 0, %s33
    %s36 = ssub.s32 %s17, %s31
    %s37 = ssub.s32 %s16, %s35
    %s38 = sor.u32 %s36, %s37
    %s39 = ssub.s32 %s18, %s27
    %s40 = sor.u32 %s38, %s39
    %p41 = scmp.eq.s32.totalorder %s40, 0
    %s43 = sadd.s32 %s42, 1
    %s44 = scalar_select %p41, %s42, %s43
    %p47 = pneg %p41
    %p48 = scmp.eq.s32.totalorder %s9, 1
    %p49 = por %p47, %p48
    %p50 = scmp.ne.s32.totalorder %s42, %s45
    %p51 = scmp.eq.s32.totalorder %s9, 0
    %p52 = por %p50, %p51
    %p53 = scmp.ne.s32.totalorder %s42, %s45
    %p54 = scmp.eq.s32.totalorder %s14, 1
    %p55 = por %p53, %p54
    %p56 = scmp.ne.s32.totalorder %s45, %s46
    %p57 = scmp.eq.s32.totalorder %s14, 0
    %p58 = por %p56, %p57
    %p59 = scmp.ne.s32.totalorder %s45, %s46
    %p60 = scmp.eq.s32.totalorder %s15, 1
    %p61 = por %p59, %p60
    %p63 = scmp.ne.s32.totalorder %s46, %s62
    %p64 = scmp.eq.s32.totalorder %s15, 0
    %p65 = por %p63, %p64
    %s66 = ssub.s32 %s16, %s35
    %p67 = scmp.eq.s32.totalorder %s66, 0
    %s69 = sadd.s32 %s68, 1
    %s70 = scalar_select %p67, %s68, %s69
    %p73 = pneg %p67
    %p74 = scmp.eq.s32.totalorder %s9, 1
    %p75 = por %p73, %p74
    %p76 = scmp.ne.s32.totalorder %s68, %s71
    %p77 = scmp.eq.s32.totalorder %s9, 0
    %p78 = por %p76, %p77
    %p79 = scmp.ne.s32.totalorder %s68, %s71
    %p80 = scmp.eq.s32.totalorder %s14, 1
    %p81 = por %p79, %p80
    %p82 = scmp.ne.s32.totalorder %s71, %s72
    %p83 = scmp.eq.s32.totalorder %s14, 0
    %p84 = por %p82, %p83
    %p85 = scmp.ne.s32.totalorder %s71, %s72
    %p86 = scmp.eq.s32.totalorder %s15, 1
    %p87 = por %p85, %p86
    %p89 = scmp.ne.s32.totalorder %s72, %s88
    %p90 = scmp.eq.s32.totalorder %s15, 0
    %p91 = por %p89, %p90
    %s92 = ssub.s32 %s16, %s35
    %p93 = scmp.eq.s32.totalorder %s92, 0
    %s95 = sadd.s32 %s94, 1
    %s96 = scalar_select %p93, %s94, %s95
    %p99 = pneg %p93
    %p100 = scmp.eq.s32.totalorder %s9, 1
    %p101 = por %p99, %p100
    %p102 = scmp.ne.s32.totalorder %s94, %s97
    %p103 = scmp.eq.s32.totalorder %s9, 0
    %p104 = por %p102, %p103
    %p105 = scmp.ne.s32.totalorder %s94, %s97
    %p106 = scmp.eq.s32.totalorder %s14, 1
    %p107 = por %p105, %p106
    %p108 = scmp.ne.s32.totalorder %s97, %s98
    %p109 = scmp.eq.s32.totalorder %s14, 0
    %p110 = por %p108, %p109
    %p111 = scmp.ne.s32.totalorder %s97, %s98
    %p112 = scmp.eq.s32.totalorder %s15, 1
    %p113 = por %p111, %p112
    %p115 = scmp.ne.s32.totalorder %s98, %s114
    %p116 = scmp.eq.s32.totalorder %s15, 0
    %p117 = por %p115, %p116
    %s118 = ssub.s32 %s17, %s31
    %s119 = ssub.s32 %s16, %s35
    %s120 = sor.u32 %s118, %s119
    %s121 = ssub.s32 %s18, %s27
    %s122 = sor.u32 %s120, %s121
    %p123 = scmp.eq.s32.totalorder %s122, 0
    %s125 = sadd.s32 %s124, 1
    %s126 = scalar_select %p123, %s124, %s125
    %p129 = pneg %p123
    %p130 = scmp.eq.s32.totalorder %s9, 1
    %p131 = por %p129, %p130
    %p132 = scmp.ne.s32.totalorder %s124, %s127
    %p133 = scmp.eq.s32.totalorder %s9, 0
    %p134 = por %p132, %p133
    %p135 = scmp.ne.s32.totalorder %s124, %s127
    %p136 = scmp.eq.s32.totalorder %s14, 1
    %p137 = por %p135, %p136
    %p138 = scmp.ne.s32.totalorder %s127, %s128
    %p139 = scmp.eq.s32.totalorder %s14, 0
    %p140 = por %p138, %p139
    %p141 = scmp.ne.s32.totalorder %s127, %s128
    %p142 = scmp.eq.s32.totalorder %s15, 1
    %p143 = por %p141, %p142
    %p145 = scmp.ne.s32.totalorder %s128, %s144
    %p146 = scmp.eq.s32.totalorder %s15, 0
    %p147 = por %p145, %p146
    %p148 = scmp.le.s32.totalorder 1, %s9
    %p149 = scmp.lt.s32.totalorder %s9, 3
    %p150 = pnand %p148, %p149
    %p151 = pneg %p150
    // Predicated region
    $region9: #{batch_norm_forward.3} parent=5 // pred_check
      _
    $region10: #{batch_norm_forward.3} parent=5 // pred_check_branch
      %153 = sbr.rel (%p150) target = $region12
    $region11: #{batch_norm_forward.3} parent=5 // pred_region
      %s154 = ssub.s32 %s9, 1
      // Predicated region
      $region13: #{batch_norm_forward.3} parent=11 // pred_check
        %p155 = pneg %p84
      $region14: #{batch_norm_forward.3} parent=11 // pred_check_branch
        %157 = sbr.rel (%p155) target = $region16
      $region15: #{batch_norm_forward.3} parent=11 // pred_region
        %p158 = scmp.lt.s32.totalorder %s19, 0
        %s159 = scalar_select %p158, %s19, 0
        %s160 = smul.addr %s159, 4
        %s161 = scalar_lea.vmem %s1, %s160
      $region16: #{batch_norm_forward.3} parent=11 // pred_fallthru
        _
      // Predicated region
      $region17: #{batch_norm_forward.3} parent=11 // pred_check
        %p162 = pneg %p110
      $region18: #{batch_norm_forward.3} parent=11 // pred_check_branch
        %164 = sbr.rel (%p162) target = $region20
      $region19: #{batch_norm_forward.3} parent=11 // pred_region
        %p165 = scmp.lt.s32.totalorder %s19, 0
        %s166 = scalar_select %p165, %s19, 0
        %s167 = smul.addr %s166, 4
        %s168 = scalar_lea.vmem %s2, %s167
      $region20: #{batch_norm_forward.3} parent=11 // pred_fallthru
        _
    $region12: #{batch_norm_forward.3} parent=5 // pred_fallthru
      _
    %p169 = scmp.lt.s32.totalorder %s9, 2
    // Predicated region
    $region21: #{batch_norm_forward.3} parent=5 // pred_check
      %p170 = pneg %p169
    $region22: #{batch_norm_forward.3} parent=5 // pred_check_branch
      %172 = sbr.rel (%p170) target = $region24
    $region23: #{batch_norm_forward.3} parent=5 // pred_region
      // Predicated region
      $region25: #{batch_norm_forward.3} parent=23 // pred_check
        %p173 = pneg %p52
      $region26: #{batch_norm_forward.3} parent=23 // pred_check_branch
        %175 = sbr.rel (%p173) target = $region28
      $region27: #{batch_norm_forward.3} parent=23 // pred_region
        %s176 = smul.u32 2, %s18
        %p177 = scmp.lt.s32.totalorder %s17, 1
        %s178 = scalar_select %p177, %s17, 1
        %p179 = scmp.lt.s32.totalorder %s16, 0
        %s180 = scalar_select %p179, %s16, 0
        %p181 = scmp.lt.s32.totalorder %s176, 1
        %s182 = scalar_select %p181, %s176, 1
        %s183 = smul.addr %s180, 2
        %s184 = sadd.s32 %s182, %s183
        %s185 = smul.addr %s178, 2
        %s186 = sadd.s32 %s184, %s185
        %s187 = smul.addr %s186, 4
        %s188 = scalar_lea.vmem %s0, %s187
        %s189 = smul.u32 2, %s18
      $region28: #{batch_norm_forward.3} parent=23 // pred_fallthru
        _
    $region24: #{batch_norm_forward.3} parent=5 // pred_fallthru
      _
    %p190 = scmp.le.s32.totalorder 1, %s9
    %p191 = scmp.lt.s32.totalorder %s9, 3
    %p192 = pnand %p190, %p191
    %p193 = pneg %p192
    // Predicated region
    $region29: #{batch_norm_forward.3} parent=5 // pred_check
      _
    $region30: #{batch_norm_forward.3} parent=5 // pred_check_branch
      %195 = sbr.rel (%p192) target = $region32
    $region31: #{batch_norm_forward.3} parent=5 // pred_region
      %s196 = ssub.s32 %s9, 1
      %s197 = smul.u32 2, %s21
      %p198 = scmp.lt.s32.totalorder %s20, 1
      %s199 = scalar_select %p198, %s20, 1
      %p200 = scmp.lt.s32.totalorder %s19, 0
      %s201 = scalar_select %p200, %s19, 0
      %p202 = scmp.lt.s32.totalorder %s197, 1
      %s203 = scalar_select %p202, %s197, 1
      %s204 = smul.addr %s201, 2
      %s205 = sadd.s32 %s203, %s204
      %s206 = smul.addr %s199, 2
      %s207 = sadd.s32 %s205, %s206
      %s208 = smul.addr %s207, 4
      %s209 = scalar_lea.vmem %s0, %s208
      %p210 = pneg %p58
      %p211 = pneg %p55
      %p212 = scmp.lt.s32.totalorder %s19, 0
      %s213 = scalar_select %p212, %s19, 0
      %s214 = smul.addr %s213, 4
      %s215 = scalar_lea.vmem %s1, %s214
      %p216 = pneg %p84
      %p217 = pneg %p81
      %p218 = scmp.lt.s32.totalorder %s19, 0
      %s219 = scalar_select %p218, %s19, 0
      %s220 = smul.addr %s219, 4
      %s221 = scalar_lea.vmem %s2, %s220
      %p222 = pneg %p110
      %p223 = pneg %p107
      %p224 = pneg %p140
      %p225 = pneg %p137
      %s226 = smul.u32 2, %s21
      %p227 = scmp.lt.s32.totalorder %s20, 1
      %s228 = scalar_select %p227, %s20, 1
      %p229 = scmp.lt.s32.totalorder %s19, 0
      %s230 = scalar_select %p229, %s19, 0
      %p231 = scmp.lt.s32.totalorder %s226, 1
      %s232 = scalar_select %p231, %s226, 1
      %s233 = smul.addr %s230, 2
      %s234 = sadd.s32 %s232, %s233
      %s235 = smul.addr %s228, 2
      %s236 = sadd.s32 %s234, %s235
      %s237 = smul.addr %s236, 4
      %s238 = scalar_lea.vmem %s3, %s237
      %s239 = smul.u32 2, %s21
      %p240 = scmp.lt.s32.totalorder %s20, 1
      %s241 = scalar_select %p240, %s20, 1
      %p242 = scmp.lt.s32.totalorder %s19, 0
      %s243 = scalar_select %p242, %s19, 0
      %p244 = scmp.lt.s32.totalorder %s239, 1
      %s245 = scalar_select %p244, %s239, 1
      %s246 = smul.addr %s243, 2
      %s247 = sadd.s32 %s245, %s246
      %s248 = smul.addr %s241, 2
      %s249 = sadd.s32 %s247, %s248
      %s250 = smul.addr %s249, 4
      %s251 = scalar_lea.vmem %s0, %s250
      %s252 = smul.u32 2, %s21
      %p253 = scmp.lt.s32.totalorder %s19, 0
      %s254 = scalar_select %p253, %s19, 0
      %s255 = smul.addr %s254, 4
      %s256 = scalar_lea.vmem %s1, %s255
      %p257 = scmp.lt.s32.totalorder %s19, 0
      %s258 = scalar_select %p257, %s19, 0
      %s259 = smul.addr %s258, 4
      %s260 = scalar_lea.vmem %s2, %s259
      %s261 = smul.u32 2, %s21
      %p262 = scmp.lt.s32.totalorder %s20, 1
      %s263 = scalar_select %p262, %s20, 1
      %p264 = scmp.lt.s32.totalorder %s19, 0
      %s265 = scalar_select %p264, %s19, 0
      %p266 = scmp.lt.s32.totalorder %s261, 1
      %s267 = scalar_select %p266, %s261, 1
      %s268 = smul.addr %s265, 2
      %s269 = sadd.s32 %s267, %s268
      %s270 = smul.addr %s263, 2
      %s271 = sadd.s32 %s269, %s270
      %s272 = smul.addr %s271, 4
      %s273 = scalar_lea.vmem %s3, %s272
      %s274 = smul.u32 2, %s21
      %v275 = vld [vmem:[%s251] sm:$0xff]
      %v276 = vld [vmem:[%s256] sm:$0xf]
      %278 = vset.pattern.permute.xlu0 0
      %279 = vperm.xlu0 %278, %v276
      %v280 = vpop.permute.xlu0 %279
      %v282 = vunpack.c.l.s4 839922192
      %v283 = vunpack.c.0.s8 %v282
      %v284 = vperm.slane %v280, %v283
      %v286 = vmul.f32 %v275, %v284
      %v287 = vld [vmem:[%s260] sm:$0xf]
      %289 = vset.pattern.permute.xlu0 0
      %290 = vperm.xlu0 %289, %v287
      %v291 = vpop.permute.xlu0 %290
      %v293 = vunpack.c.l.s4 839922192
      %v294 = vunpack.c.0.s8 %v293
      %v295 = vperm.slane %v291, %v294
      %v297 = vadd.f32 %v286, %v295
      %298 = vst [vmem:[%s273] sm:$0xff] %v297
      %s299 = smul.u32 2, %s21
      %p300 = scmp.lt.s32.totalorder %s20, 1
      %s301 = scalar_select %p300, %s20, 1
      %p302 = scmp.lt.s32.totalorder %s19, 0
      %s303 = scalar_select %p302, %s19, 0
      %p304 = scmp.lt.s32.totalorder %s299, 1
      %s305 = scalar_select %p304, %s299, 1
      %s306 = smul.addr %s303, 2
      %s307 = sadd.s32 %s305, %s306
      %s308 = smul.addr %s301, 2
      %s309 = sadd.s32 %s307, %s308
      %s310 = smul.addr %s309, 4
      %s311 = scalar_lea.vmem %s3, %s310
      // Predicated region
      $region33: #{batch_norm_forward.3} parent=31 // pred_check
        %p312 = pneg %p137
      $region34: #{batch_norm_forward.3} parent=31 // pred_check_branch
        %314 = sbr.rel (%p312) target = $region36
      $region35: #{batch_norm_forward.3} parent=31 // pred_region
        %s315 = smul.u32 2, %s21
      $region36: #{batch_norm_forward.3} parent=31 // pred_fallthru
        _
    $region32: #{batch_norm_forward.3} parent=5 // pred_fallthru
      _
    %p316 = scmp.le.s32.totalorder 2, %s9
    // Predicated region
    $region37: #{batch_norm_forward.3} parent=5 // pred_check
      %p317 = pneg %p316
    $region38: #{batch_norm_forward.3} parent=5 // pred_check_branch
      %319 = sbr.rel (%p317) target = $region40
    $region39: #{batch_norm_forward.3} parent=5 // pred_region
      %s320 = ssub.s32 %s9, 2
      // Predicated region
      $region41: #{batch_norm_forward.3} parent=39 // pred_check
        %p321 = pneg %p143
      $region42: #{batch_norm_forward.3} parent=39 // pred_check_branch
        %323 = sbr.rel (%p321) target = $region44
      $region43: #{batch_norm_forward.3} parent=39 // pred_region
        %s324 = smul.u32 2, %s24
        %p325 = scmp.lt.s32.totalorder %s23, 1
        %s326 = scalar_select %p325, %s23, 1
        %p327 = scmp.lt.s32.totalorder %s22, 0
        %s328 = scalar_select %p327, %s22, 0
        %p329 = scmp.lt.s32.totalorder %s324, 1
        %s330 = scalar_select %p329, %s324, 1
        %s331 = smul.addr %s328, 2
        %s332 = sadd.s32 %s330, %s331
        %s333 = smul.addr %s326, 2
        %s334 = sadd.s32 %s332, %s333
        %s335 = smul.addr %s334, 4
        %s336 = scalar_lea.vmem %s3, %s335
      $region44: #{batch_norm_forward.3} parent=39 // pred_fallthru
        _
    $region40: #{batch_norm_forward.3} parent=5 // pred_fallthru
      _
  $region6: #{batch_norm_forward.3} parent=0 // loop_footer
    %s13 = sadd.s32 1, %s9
  $region7: #{batch_norm_forward.3} parent=0 // loop_footer_branch
    %8 = sbr.rel target = $region3
  $region8: #{batch_norm_forward.3} parent=0 // loop_exit
    _

// kernel: batch_norm_forward.2
$region0: #{batch_norm_forward.2}
  #allocation0 [shape = 'u32[]', space=smem, size = 0x4, offset = 0x4, fixed_abs, tag = 'smem constant byte address 0x4 - core index']
  #allocation1 [shape = 'u32[72,128]{1,0:T(1,128)}', space=vmem, size = 0x9000, scoped, tag = 'internal scratch']
  %s0 = inlined_call_operand.vmem [shape: f32[2,4,256], index: 0, kind: input, shape index: {}]
  %s1 = inlined_call_operand.vmem [shape: f32[4,1], index: 1, kind: output, shape index: {0}]
  %s2 = inlined_call_operand.vmem [shape: f32[4,1], index: 2, kind: output, shape index: {1}]
  %3 = xla_tuple %s1, %s2
  %s4 = sld [smem:[#allocation0]]
  $region49: #{batch_norm_forward.2} parent=0
    _
  %s6 = ssub.s32 1, %s4
  %s7 = scalar_select 0, %s6, %s4
  loop: start=0, step=1, limit=4
  $region2: #{batch_norm_forward.2} parent=0 // loop_pre_header
    _
  $region3: #{batch_norm_forward.2} parent=0 // loop_header
    %s9 = sphi 0, %s13
    %p10 = scmp.ge.s32.totalorder %s9, 4
    %s16 = sphi 0, %s35
    %s17 = sphi 0, %s31
    %s18 = sphi 0, %s27
    %s19 = sphi 0, %s16
    %s20 = sphi 0, %s17
    %s21 = sphi 0, %s18
    %s22 = sphi 0, %s19
    %s23 = sphi 0, %s20
    %s24 = sphi 0, %s21
    %s42 = sphi 0, %s44
    %s45 = sphi 0, %s42
    %s46 = sphi 0, %s45
    %s62 = sphi 0, %s46
    %s68 = sphi 0, %s70
    %s71 = sphi 0, %s68
    %s72 = sphi 0, %s71
    %s88 = sphi 0, %s72
    %s94 = sphi 0, %s96
    %s97 = sphi 0, %s94
    %s98 = sphi 0, %s97
    %s114 = sphi 0, %s98
  $region4: #{batch_norm_forward.2} parent=0 // loop_header_branch
    %12 = sbr.rel (%p10) target = $region8
  $region5: #{batch_norm_forward.2} parent=0 // loop_body
    %s14 = ssub.s32 %s9, 1
    %s15 = ssub.s32 %s9, 2
    %s25 = sadd.s32 1, %s18
    %p26 = scmp.ge.s32.totalorder %s25, 1
    %s27 = scalar_select %p26, 0, %s25
    %s28 = sadd.s32 1, %s17
    %s29 = scalar_select %p26, %s28, %s17
    %p30 = scmp.ge.s32.totalorder %s29, 2
    %s31 = scalar_select %p30, 0, %s29
    %s32 = sadd.s32 1, %s16
    %s33 = scalar_select %p30, %s32, %s16
    %p34 = scmp.ge.s32.totalorder %s33, 1
    %s35 = scalar_select %p34, 0, %s33
    %s36 = ssub.s32 %s17, %s31
    %s37 = ssub.s32 %s16, %s35
    %s38 = sor.u32 %s36, %s37
    %s39 = ssub.s32 %s18, %s27
    %s40 = sor.u32 %s38, %s39
    %p41 = scmp.eq.s32.totalorder %s40, 0
    %s43 = sadd.s32 %s42, 1
    %s44 = scalar_select %p41, %s42, %s43
    %p47 = pneg %p41
    %p48 = scmp.eq.s32.totalorder %s9, 1
    %p49 = por %p47, %p48
    %p50 = scmp.ne.s32.totalorder %s42, %s45
    %p51 = scmp.eq.s32.totalorder %s9, 0
    %p52 = por %p50, %p51
    %p53 = scmp.ne.s32.totalorder %s42, %s45
    %p54 = scmp.eq.s32.totalorder %s14, 1
    %p55 = por %p53, %p54
    %p56 = scmp.ne.s32.totalorder %s45, %s46
    %p57 = scmp.eq.s32.totalorder %s14, 0
    %p58 = por %p56, %p57
    %p59 = scmp.ne.s32.totalorder %s45, %s46
    %p60 = scmp.eq.s32.totalorder %s15, 1
    %p61 = por %p59, %p60
    %p63 = scmp.ne.s32.totalorder %s46, %s62
    %p64 = scmp.eq.s32.totalorder %s15, 0
    %p65 = por %p63, %p64
    %s66 = ssub.s32 %s16, %s35
    %p67 = scmp.eq.s32.totalorder %s66, 0
    %s69 = sadd.s32 %s68, 1
    %s70 = scalar_select %p67, %s68, %s69
    %p73 = pneg %p67
    %p74 = scmp.eq.s32.totalorder %s9, 1
    %p75 = por %p73, %p74
    %p76 = scmp.ne.s32.totalorder %s68, %s71
    %p77 = scmp.eq.s32.totalorder %s9, 0
    %p78 = por %p76, %p77
    %p79 = scmp.ne.s32.totalorder %s68, %s71
    %p80 = scmp.eq.s32.totalorder %s14, 1
    %p81 = por %p79, %p80
    %p82 = scmp.ne.s32.totalorder %s71, %s72
    %p83 = scmp.eq.s32.totalorder %s14, 0
    %p84 = por %p82, %p83
    %p85 = scmp.ne.s32.totalorder %s71, %s72
    %p86 = scmp.eq.s32.totalorder %s15, 1
    %p87 = por %p85, %p86
    %p89 = scmp.ne.s32.totalorder %s72, %s88
    %p90 = scmp.eq.s32.totalorder %s15, 0
    %p91 = por %p89, %p90
    %s92 = ssub.s32 %s16, %s35
    %p93 = scmp.eq.s32.totalorder %s92, 0
    %s95 = sadd.s32 %s94, 1
    %s96 = scalar_select %p93, %s94, %s95
    %p99 = pneg %p93
    %p100 = scmp.eq.s32.totalorder %s9, 1
    %p101 = por %p99, %p100
    %p102 = scmp.ne.s32.totalorder %s94, %s97
    %p103 = scmp.eq.s32.totalorder %s9, 0
    %p104 = por %p102, %p103
    %p105 = scmp.ne.s32.totalorder %s94, %s97
    %p106 = scmp.eq.s32.totalorder %s14, 1
    %p107 = por %p105, %p106
    %p108 = scmp.ne.s32.totalorder %s97, %s98
    %p109 = scmp.eq.s32.totalorder %s14, 0
    %p110 = por %p108, %p109
    %p111 = scmp.ne.s32.totalorder %s97, %s98
    %p112 = scmp.eq.s32.totalorder %s15, 1
    %p113 = por %p111, %p112
    %p115 = scmp.ne.s32.totalorder %s98, %s114
    %p116 = scmp.eq.s32.totalorder %s15, 0
    %p117 = por %p115, %p116
    %p118 = scmp.le.s32.totalorder 1, %s9
    %p119 = scmp.lt.s32.totalorder %s9, 3
    %p120 = pnand %p118, %p119
    %p121 = pneg %p120
    // Predicated region
    $region9: #{batch_norm_forward.2} parent=5 // pred_check
      _
    $region10: #{batch_norm_forward.2} parent=5 // pred_check_branch
      %123 = sbr.rel (%p120) target = $region12
    $region11: #{batch_norm_forward.2} parent=5 // pred_region
      %s124 = ssub.s32 %s9, 1
    $region12: #{batch_norm_forward.2} parent=5 // pred_fallthru
      _
    %p125 = scmp.lt.s32.totalorder %s9, 2
    // Predicated region
    $region13: #{batch_norm_forward.2} parent=5 // pred_check
      %p126 = pneg %p125
    $region14: #{batch_norm_forward.2} parent=5 // pred_check_branch
      %128 = sbr.rel (%p126) target = $region16
    $region15: #{batch_norm_forward.2} parent=5 // pred_region
      // Predicated region
      $region17: #{batch_norm_forward.2} parent=15 // pred_check
        %p129 = pneg %p52
      $region18: #{batch_norm_forward.2} parent=15 // pred_check_branch
        %131 = sbr.rel (%p129) target = $region20
      $region19: #{batch_norm_forward.2} parent=15 // pred_region
        %s132 = smul.u32 2, %s18
        %p133 = scmp.lt.s32.totalorder %s17, 1
        %s134 = scalar_select %p133, %s17, 1
        %p135 = scmp.lt.s32.totalorder %s16, 0
        %s136 = scalar_select %p135, %s16, 0
        %p137 = scmp.lt.s32.totalorder %s132, 1
        %s138 = scalar_select %p137, %s132, 1
        %s139 = smul.addr %s136, 2
        %s140 = sadd.s32 %s138, %s139
        %s141 = smul.addr %s134, 2
        %s142 = sadd.s32 %s140, %s141
        %s143 = smul.addr %s142, 4
        %s144 = scalar_lea.vmem %s0, %s143
        %s145 = smul.u32 2, %s18
      $region20: #{batch_norm_forward.2} parent=15 // pred_fallthru
        _
    $region16: #{batch_norm_forward.2} parent=5 // pred_fallthru
      _
    %p146 = scmp.le.s32.totalorder 1, %s9
    %p147 = scmp.lt.s32.totalorder %s9, 3
    %p148 = pnand %p146, %p147
    %p149 = pneg %p148
    // Predicated region
    $region21: #{batch_norm_forward.2} parent=5 // pred_check
      _
    $region22: #{batch_norm_forward.2} parent=5 // pred_check_branch
      %151 = sbr.rel (%p148) target = $region24
    $region23: #{batch_norm_forward.2} parent=5 // pred_region
      %s152 = ssub.s32 %s9, 1
      %s153 = smul.u32 2, %s21
      %p154 = scmp.lt.s32.totalorder %s20, 1
      %s155 = scalar_select %p154, %s20, 1
      %p156 = scmp.lt.s32.totalorder %s19, 0
      %s157 = scalar_select %p156, %s19, 0
      %p158 = scmp.lt.s32.totalorder %s153, 1
      %s159 = scalar_select %p158, %s153, 1
      %s160 = smul.addr %s157, 2
      %s161 = sadd.s32 %s159, %s160
      %s162 = smul.addr %s155, 2
      %s163 = sadd.s32 %s161, %s162
      %s164 = smul.addr %s163, 4
      %s165 = scalar_lea.vmem %s0, %s164
      %p166 = pneg %p58
      %p167 = pneg %p55
      %p168 = pneg %p84
      %p169 = pneg %p81
      %p170 = scmp.lt.s32.totalorder %s19, 0
      %s171 = scalar_select %p170, %s19, 0
      %s172 = smul.addr %s171, 4
      %s173 = scalar_lea.vmem %s1, %s172
      %p174 = pneg %p110
      %p175 = pneg %p107
      %p176 = scmp.lt.s32.totalorder %s19, 0
      %s177 = scalar_select %p176, %s19, 0
      %s178 = smul.addr %s177, 4
      %s179 = scalar_lea.vmem %s2, %s178
      %s180 = smul.u32 2, %s21
      %p181 = scmp.lt.s32.totalorder %s20, 1
      %s182 = scalar_select %p181, %s20, 1
      %p183 = scmp.lt.s32.totalorder %s19, 0
      %s184 = scalar_select %p183, %s19, 0
      %p185 = scmp.lt.s32.totalorder %s180, 1
      %s186 = scalar_select %p185, %s180, 1
      %s187 = smul.addr %s184, 2
      %s188 = sadd.s32 %s186, %s187
      %s189 = smul.addr %s182, 2
      %s190 = sadd.s32 %s188, %s189
      %s191 = smul.addr %s190, 4
      %s192 = scalar_lea.vmem %s0, %s191
      %s193 = smul.u32 2, %s21
      %p194 = scmp.lt.s32.totalorder %s19, 0
      %s195 = scalar_select %p194, %s19, 0
      %s196 = smul.addr %s195, 4
      %s197 = scalar_lea.vmem %s1, %s196
      %p198 = scmp.lt.s32.totalorder %s19, 0
      %s199 = scalar_select %p198, %s19, 0
      %s200 = smul.addr %s199, 4
      %s201 = scalar_lea.vmem %s2, %s200
      %p202 = scmp.eq.s32.totalorder %s20, 0
      %p203 = scmp.eq.s32.totalorder %s21, 0
      %p204 = pnand %p202, %p203
      %p205 = pneg %p204
      // Predicated region
      $region25: #{batch_norm_forward.2} parent=23 // pred_check
        _
      $region26: #{batch_norm_forward.2} parent=23 // pred_check_branch
        %207 = sbr.rel (%p204) target = $region28
      $region27: #{batch_norm_forward.2} parent=23 // pred_region
        %vm208 = vcmask 3072
        %209 = vst.msk [vmem:[%s197] sm:$0xf] %vm208, 0.0
        %210 = vst.msk [vmem:[%s201] sm:$0xf] %vm208, 0.0
      $region28: #{batch_norm_forward.2} parent=23 // pred_fallthru
        _
      %v211 = vld [vmem:[%s192] sm:$0xff]
      %v212 = vld [vmem:[%s197] sm:$0xf]
      %214 = vst [vmem:[#allocation1] ss:$2 sm:$0xff] %v211
      %v215 = vld.sshfl [vmem:[#allocation1] sm:$0xff pattern:$0x75316420]
      %v216 = vld.sshfl [vmem:[#allocation1 + $0x8] sm:$0xff pattern:$0x75316420]
      %vm219 = vcmask 1043456
      %v220 = vsel %vm219, %v215, 0.0
      %v221 = vsel %vm219, %v216, 0.0
      %v222 = vadd.f32 %v220, %v221
      %223 = vadd.xlane.f32.xlu0 %v222
      %v224 = vpop.xlane.xlu0 %223
      %v225 = vadd.f32 %v212, %v224
      %vm226 = vcmask 3072
      %227 = vst.msk [vmem:[%s197] sm:$0xf] %vm226, %v225
      %v228 = vld [vmem:[%s201] sm:$0xf]
      %v229 = vmul.f32 %v211, %v211
      %231 = vst [vmem:[#allocation1] ss:$2 sm:$0xff] %v229
      %v232 = vld.sshfl [vmem:[#allocation1] sm:$0xff pattern:$0x75316420]
      %v233 = vld.sshfl [vmem:[#allocation1 + $0x8] sm:$0xff pattern:$0x75316420]
      %v236 = vsel %vm219, %v232, 0.0
      %v237 = vsel %vm219, %v233, 0.0
      %v238 = vadd.f32 %v236, %v237
      %239 = vadd.xlane.f32.xlu0 %v238
      %v240 = vpop.xlane.xlu0 %239
      %v241 = vadd.f32 %v228, %v240
      %242 = vst.msk [vmem:[%s201] sm:$0xf] %vm226, %v241
      %p243 = scmp.lt.s32.totalorder %s19, 0
      %s244 = scalar_select %p243, %s19, 0
      %s245 = smul.addr %s244, 4
      %s246 = scalar_lea.vmem %s1, %s245
      %p247 = scmp.lt.s32.totalorder %s19, 0
      %s248 = scalar_select %p247, %s19, 0
      %s249 = smul.addr %s248, 4
      %s250 = scalar_lea.vmem %s2, %s249
      // Predicated region
      $region29: #{batch_norm_forward.2} parent=23 // pred_check
        %p251 = pneg %p81
      $region30: #{batch_norm_forward.2} parent=23 // pred_check_branch
        %253 = sbr.rel (%p251) target = $region32
      $region31: #{batch_norm_forward.2} parent=23 // pred_region
        _
      $region32: #{batch_norm_forward.2} parent=23 // pred_fallthru
        _
      // Predicated region
      $region33: #{batch_norm_forward.2} parent=23 // pred_check
        %p254 = pneg %p107
      $region34: #{batch_norm_forward.2} parent=23 // pred_check_branch
        %256 = sbr.rel (%p254) target = $region36
      $region35: #{batch_norm_forward.2} parent=23 // pred_region
        _
      $region36: #{batch_norm_forward.2} parent=23 // pred_fallthru
        _
      // Predicated region
      $region37: #{batch_norm_forward.2} parent=23 // pred_check
        %p257 = pneg %p81
      $region38: #{batch_norm_forward.2} parent=23 // pred_check_branch
        %259 = sbr.rel (%p257) target = $region40
      $region39: #{batch_norm_forward.2} parent=23 // pred_region
        %p260 = scmp.lt.s32.totalorder %s19, 0
        %s261 = scalar_select %p260, %s19, 0
        %s262 = smul.addr %s261, 4
        %s263 = scalar_lea.vmem %s1, %s262
      $region40: #{batch_norm_forward.2} parent=23 // pred_fallthru
        _
      // Predicated region
      $region41: #{batch_norm_forward.2} parent=23 // pred_check
        %p264 = pneg %p107
      $region42: #{batch_norm_forward.2} parent=23 // pred_check_branch
        %266 = sbr.rel (%p264) target = $region44
      $region43: #{batch_norm_forward.2} parent=23 // pred_region
        %p267 = scmp.lt.s32.totalorder %s19, 0
        %s268 = scalar_select %p267, %s19, 0
        %s269 = smul.addr %s268, 4
        %s270 = scalar_lea.vmem %s2, %s269
      $region44: #{batch_norm_forward.2} parent=23 // pred_fallthru
        _
    $region24: #{batch_norm_forward.2} parent=5 // pred_fallthru
      _
    %p271 = scmp.le.s32.totalorder 2, %s9
    // Predicated region
    $region45: #{batch_norm_forward.2} parent=5 // pred_check
      %p272 = pneg %p271
    $region46: #{batch_norm_forward.2} parent=5 // pred_check_branch
      %274 = sbr.rel (%p272) target = $region48
    $region47: #{batch_norm_forward.2} parent=5 // pred_region
      %s275 = ssub.s32 %s9, 2
    $region48: #{batch_norm_forward.2} parent=5 // pred_fallthru
      _
  $region6: #{batch_norm_forward.2} parent=0 // loop_footer
    %s13 = sadd.s32 1, %s9
  $region7: #{batch_norm_forward.2} parent=0 // loop_footer_branch
    %8 = sbr.rel target = $region3
  $region8: #{batch_norm_forward.2} parent=0 // loop_exit
    _

</llo_original>
